<compile_context>
chip_gen: v7x
topology: tpu7x:2x2x1
jax: 0.10.0
libtpu: 0.0.40
codegen_flags: <defaults>
</compile_context>

<pallas_src>
import jax
import jax.numpy as jnp
import numpy as np
from jax.experimental import pallas as pl
from jax.experimental.pallas import tpu as pltpu

FEAT_PAD = 128          # lane-dense padded feature width for all layers
NUM_CONV = 5            # conv1..conv5
NUM_CLASSES = 10


# ----------------------------- Pallas kernel --------------------------------
def gcn_net_kernel(a_ref, x_ref, mask_t_ref, w_ref, b_ref, out_ref, pooled_ref):
    # a_ref:      (N, N)        bf16   normalized adjacency D^-1/2 (A+I) D^-1/2
    # x_ref:      (N, 128)      bf16   node features, zero-padded beyond F_in
    # mask_t_ref: (N, G)        f32    per-graph node membership (transposed)
    # w_ref:      (7, 128, 128) bf16   zero-padded weights (5 convs + 2 linears)
    # b_ref:      (8, 128)      f32    zero-padded biases
    # out_ref:    (G, 128)      f32    logits (cols >= 10 are zero)
    # pooled_ref: (G, 128)      f32    VMEM scratch for the pooled features

    h = x_ref[...]                                            # (N, 128) bf16

    # --- 5 GCN layers: agg = A_hat @ H first (cheap width), then agg @ W ---
    for i in range(NUM_CONV):
        agg = jnp.dot(a_ref[...], h,
                      preferred_element_type=jnp.float32)     # (N, 128) f32
        z = jnp.dot(agg.astype(jnp.bfloat16), w_ref[i],
                    preferred_element_type=jnp.float32)       # (N, 128) f32
        # f32 epilogue (bias + ReLU); padded columns stay exactly zero.
        h = jnp.maximum(z + b_ref[i:i + 1, :], 0.0).astype(jnp.bfloat16)

    # --- scatter_max global pooling (h >= 0 post-ReLU, so mask-by-multiply) ---
    h_f32 = h.astype(jnp.float32)                             # (N, 128) >= 0
    num_graphs = pooled_ref.shape[0]
    for g in range(num_graphs):                               # tiny static unroll
        col = mask_t_ref[:, g:g + 1]                          # (N, 1), no transpose
        pooled_ref[g:g + 1, :] = jnp.max(h_f32 * col, axis=0, keepdims=True)

    # --- batched MLP head: two lane-dense matmuls, one full (G, 128) store ---
    pooled = pooled_ref[...].astype(jnp.bfloat16)             # (G, 128)
    z = jnp.dot(pooled, w_ref[5], preferred_element_type=jnp.float32)
    z = jnp.maximum(z + b_ref[5:6, :], 0.0)
    z = jnp.dot(z.astype(jnp.bfloat16), w_ref[6], preferred_element_type=jnp.float32)
    out_ref[...] = z + b_ref[6:7, :]                          # single lane-dense store


def net_forward(a_hat, x, mask, w_pack, b_pack, num_classes=NUM_CLASSES):
    n, f_in = x.shape
    num_graphs = mask.shape[0]
    fp = w_pack.shape[-1]

    # bf16 MXU inputs (halves HBM/VMEM traffic of the big operands).
    a_bf16 = a_hat.astype(jnp.bfloat16)                                   # (N, N)
    x_pad = (jnp.zeros((n, fp), jnp.float32)
             .at[:, :f_in].set(x)).astype(jnp.bfloat16)                   # (N, 128)
    mask_t = mask.T.astype(jnp.float32)                                   # (N, G)

    out_pad = pl.pallas_call(
        gcn_net_kernel,
        out_shape=jax.ShapeDtypeStruct((num_graphs, fp), jnp.float32),
        in_specs=[pl.BlockSpec(memory_space=pltpu.MemorySpace.VMEM)] * 5,
        out_specs=pl.BlockSpec(memory_space=pltpu.MemorySpace.VMEM),
        scratch_shapes=[pltpu.VMEM((num_graphs, fp), jnp.float32)],
    )(a_bf16, x_pad, mask_t, w_pack, b_pack)

    return out_pad[:, :num_classes]


# ------------------------------- JAX glue ------------------------------------
def pack_params(params, fp=FEAT_PAD):
    """Pack all weights/biases into two zero-padded, lane-dense slabs."""
    ws = [w for w, _ in params["convs"]] + [params["lin1"][0], params["lin2"][0]]
    bs = [b for _, b in params["convs"]] + [params["lin1"][1], params["lin2"][1]]
    w_pack = np.zeros((len(ws), fp, fp), np.float32)
    b_pack = np.zeros((8, fp), np.float32)
    for i, (w, b) in enumerate(zip(ws, bs)):
        fi, fo = w.shape
        w_pack[i, :fi, :fo] = np.asarray(w)
        b_pack[i, :fo] = np.asarray(b)
    return jnp.asarray(w_pack, dtype=jnp.bfloat16), jnp.asarray(b_pack, dtype=jnp.float32)


def build_a_hat(edge_index, num_nodes):
    """Dense D^{-1/2}(A+I)D^{-1/2} from a (2, E) edge_index."""
    a = jnp.zeros((num_nodes, num_nodes), jnp.float32)
    a = a.at[edge_index[0], edge_index[1]].set(1.0)
    idx = jnp.arange(num_nodes)
    a = a.at[idx, idx].set(1.0)                     # add self-loops
    deg = jnp.sum(a, axis=1)
    d_inv_sqrt = 1.0 / jnp.sqrt(deg)
    return d_inv_sqrt[:, None] * a * d_inv_sqrt[None, :]


def ref_forward(a_hat, x, mask, params):
    """Pure-JAX reference mirroring the kernel's bf16-matmul / f32-epilogue math."""
    bf16 = jnp.bfloat16
    a = a_hat.astype(bf16)
    h = x.astype(bf16)
    for w, b in params["convs"]:
        agg = jnp.dot(a, h, preferred_element_type=jnp.float32)
        z = jnp.dot(agg.astype(bf16), w.astype(bf16), preferred_element_type=jnp.float32)
        h = jnp.maximum(z + b, 0.0).astype(bf16)
    hf = h.astype(jnp.float32)
    pooled = jnp.max(mask[:, :, None] * hf[None, :, :], axis=1)       # (G, 96)
    lw1, lb1 = params["lin1"]
    lw2, lb2 = params["lin2"]
    z = jnp.dot(pooled.astype(bf16), lw1.astype(bf16), preferred_element_type=jnp.float32)
    z = jnp.maximum(z + lb1, 0.0)
    z = jnp.dot(z.astype(bf16), lw2.astype(bf16), preferred_element_type=jnp.float32)
    return z + lb2


def init_params(key):
    dims = [2, 16, 32, 48, 64, 96]
    convs = []
    for i in range(NUM_CONV):
        key, kw, kb = jax.random.split(key, 3)
        fan_in, fan_out = dims[i], dims[i + 1]
        w = jax.random.normal(kw, (fan_in, fan_out), jnp.float32) * np.sqrt(2.0 / (fan_in + fan_out))
        b = jax.random.normal(kb, (fan_out,), jnp.float32) * 0.01
        convs.append((w, b))
    key, k1w, k1b, k2w, k2b = jax.random.split(key, 5)
    lin1 = (jax.random.normal(k1w, (96, 64), jnp.float32) * np.sqrt(2.0 / (96 + 64)),
            jax.random.normal(k1b, (64,), jnp.float32) * 0.01)
    lin2 = (jax.random.normal(k2w, (64, 10), jnp.float32) * np.sqrt(2.0 / (64 + 10)),
            jax.random.normal(k2b, (10,), jnp.float32) * 0.01)
    return {"convs": convs, "lin1": lin1, "lin2": lin2}


def make_batched_graph(num_graphs=2, nodes_per_graph=16):
    """Deterministic small batch of graphs: ring + hub edges, like a toy BA-2motif."""
    src, dst = [], []
    for g in range(num_graphs):
        off = g * nodes_per_graph
        for i in range(nodes_per_graph):          # ring (bidirectional)
            j = (i + 1) % nodes_per_graph
            src += [off + i, off + j]
            dst += [off + j, off + i]
        for j in (4, 8, 12):                      # hub edges from node 0
            src += [off + 0, off + j]
            dst += [off + j, off + 0]
    edge_index = jnp.asarray(np.stack([src, dst]), jnp.int32)   # (2, E)
    batch = jnp.repeat(jnp.arange(num_graphs, dtype=jnp.int32), nodes_per_graph)
    return edge_index, batch


if __name__ == "__main__":
    num_graphs, nodes_per_graph = 2, 16
    num_nodes = num_graphs * nodes_per_graph

    key = jax.random.PRNGKey(0)
    key, kx = jax.random.split(key)
    x = jax.random.normal(kx, (num_nodes, 2), jnp.float32)       # data.x
    edge_index, batch = make_batched_graph(num_graphs, nodes_per_graph)

    a_hat = build_a_hat(edge_index, num_nodes)                   # (N, N)
    mask = (batch[None, :] == jnp.arange(num_graphs)[:, None]).astype(jnp.float32)  # (G, N)

    params = init_params(key)
    w_pack, b_pack = pack_params(params)

    out = net_forward(a_hat, x, mask, w_pack, b_pack)
    out = jax.block_until_ready(out)

    ref = ref_forward(a_hat, x, mask, params)
    if not np.allclose(np.asarray(out), np.asarray(ref), rtol=2e-2, atol=2e-2):
        raise AssertionError("Pallas kernel output mismatch vs JAX reference")

    print("KERNEL_OK")
</pallas_src>

<mosaic_0001>
module attributes {stable_mosaic.version = 11 : i64} {
  func.func @gcn_net_kernel(%arg0: memref<32x32xbf16, #tpu.memory_space<vmem>>, %arg1: memref<32x128xbf16, #tpu.memory_space<vmem>>, %arg2: memref<32x2xf32, #tpu.memory_space<vmem>>, %arg3: memref<7x128x128xbf16, #tpu.memory_space<vmem>>, %arg4: memref<8x128xf32, #tpu.memory_space<vmem>>, %arg5: memref<2x128xf32, #tpu.memory_space<vmem>>, %arg6: memref<2x128xf32, #tpu.memory_space<vmem>>) attributes {dimension_semantics = [], scalar_prefetch = 0 : i64, scratch_operands = 1 : i64, tpu.core_type = #tpu.core_type<tc>} {
    %c0 = arith.constant 0 : index
    %c0_0 = arith.constant 0 : index
    %0 = vector.load %arg1[%c0, %c0_0] : memref<32x128xbf16, #tpu.memory_space<vmem>>, vector<32x128xbf16>
    %c0_1 = arith.constant 0 : index
    %c0_2 = arith.constant 0 : index
    %1 = vector.load %arg0[%c0_1, %c0_2] : memref<32x32xbf16, #tpu.memory_space<vmem>>, vector<32x32xbf16>
    %cst = arith.constant dense<0.000000e+00> : vector<32x128xf32>
    %2 = tpu.matmul %1, %0, %cst {dimension_numbers = #tpu.dot_dimension_numbers<[1], [0], [0], [1], [0, 0, 1, 1], [], []>} : vector<32x32xbf16>, vector<32x128xbf16>, vector<32x128xf32> -> vector<32x128xf32>
    %3 = arith.truncf %2 : vector<32x128xf32> to vector<32x128xbf16>
    %c0_3 = arith.constant 0 : index
    %c0_4 = arith.constant 0 : index
    %c0_5 = arith.constant 0 : index
    %4 = vector.load %arg3[%c0_3, %c0_4, %c0_5] : memref<7x128x128xbf16, #tpu.memory_space<vmem>>, vector<1x128x128xbf16>
    %5 = vector.shape_cast %4 : vector<1x128x128xbf16> to vector<128x128xbf16>
    %cst_6 = arith.constant dense<0.000000e+00> : vector<32x128xf32>
    %6 = tpu.matmul %3, %5, %cst_6 {dimension_numbers = #tpu.dot_dimension_numbers<[1], [0], [0], [1], [0, 0, 1, 1], [], []>} : vector<32x128xbf16>, vector<128x128xbf16>, vector<32x128xf32> -> vector<32x128xf32>
    %c0_7 = arith.constant 0 : index
    %c0_8 = arith.constant 0 : index
    %7 = vector.load %arg4[%c0_7, %c0_8] : memref<8x128xf32, #tpu.memory_space<vmem>>, vector<1x128xf32>
    %8 = vector.broadcast %7 : vector<1x128xf32> to vector<32x128xf32>
    %9 = arith.addf %6, %8 : vector<32x128xf32>
    %cst_9 = arith.constant 0.000000e+00 : f32
    %10 = vector.broadcast %cst_9 : f32 to vector<32x128xf32>
    %11 = arith.maximumf %9, %10 : vector<32x128xf32>
    %12 = arith.truncf %11 : vector<32x128xf32> to vector<32x128xbf16>
    %c0_10 = arith.constant 0 : index
    %c0_11 = arith.constant 0 : index
    %13 = vector.load %arg0[%c0_10, %c0_11] : memref<32x32xbf16, #tpu.memory_space<vmem>>, vector<32x32xbf16>
    %cst_12 = arith.constant dense<0.000000e+00> : vector<32x128xf32>
    %14 = tpu.matmul %13, %12, %cst_12 {dimension_numbers = #tpu.dot_dimension_numbers<[1], [0], [0], [1], [0, 0, 1, 1], [], []>} : vector<32x32xbf16>, vector<32x128xbf16>, vector<32x128xf32> -> vector<32x128xf32>
    %15 = arith.truncf %14 : vector<32x128xf32> to vector<32x128xbf16>
    %c1 = arith.constant 1 : index
    %c0_13 = arith.constant 0 : index
    %c0_14 = arith.constant 0 : index
    %16 = vector.load %arg3[%c1, %c0_13, %c0_14] : memref<7x128x128xbf16, #tpu.memory_space<vmem>>, vector<1x128x128xbf16>
    %17 = vector.shape_cast %16 : vector<1x128x128xbf16> to vector<128x128xbf16>
    %cst_15 = arith.constant dense<0.000000e+00> : vector<32x128xf32>
    %18 = tpu.matmul %15, %17, %cst_15 {dimension_numbers = #tpu.dot_dimension_numbers<[1], [0], [0], [1], [0, 0, 1, 1], [], []>} : vector<32x128xbf16>, vector<128x128xbf16>, vector<32x128xf32> -> vector<32x128xf32>
    %c1_16 = arith.constant 1 : index
    %c0_17 = arith.constant 0 : index
    %19 = vector.load %arg4[%c1_16, %c0_17] : memref<8x128xf32, #tpu.memory_space<vmem>>, vector<1x128xf32>
    %20 = vector.broadcast %19 : vector<1x128xf32> to vector<32x128xf32>
    %21 = arith.addf %18, %20 : vector<32x128xf32>
    %cst_18 = arith.constant 0.000000e+00 : f32
    %22 = vector.broadcast %cst_18 : f32 to vector<32x128xf32>
    %23 = arith.maximumf %21, %22 : vector<32x128xf32>
    %24 = arith.truncf %23 : vector<32x128xf32> to vector<32x128xbf16>
    %c0_19 = arith.constant 0 : index
    %c0_20 = arith.constant 0 : index
    %25 = vector.load %arg0[%c0_19, %c0_20] : memref<32x32xbf16, #tpu.memory_space<vmem>>, vector<32x32xbf16>
    %cst_21 = arith.constant dense<0.000000e+00> : vector<32x128xf32>
    %26 = tpu.matmul %25, %24, %cst_21 {dimension_numbers = #tpu.dot_dimension_numbers<[1], [0], [0], [1], [0, 0, 1, 1], [], []>} : vector<32x32xbf16>, vector<32x128xbf16>, vector<32x128xf32> -> vector<32x128xf32>
    %27 = arith.truncf %26 : vector<32x128xf32> to vector<32x128xbf16>
    %c2 = arith.constant 2 : index
    %c0_22 = arith.constant 0 : index
    %c0_23 = arith.constant 0 : index
    %28 = vector.load %arg3[%c2, %c0_22, %c0_23] : memref<7x128x128xbf16, #tpu.memory_space<vmem>>, vector<1x128x128xbf16>
    %29 = vector.shape_cast %28 : vector<1x128x128xbf16> to vector<128x128xbf16>
    %cst_24 = arith.constant dense<0.000000e+00> : vector<32x128xf32>
    %30 = tpu.matmul %27, %29, %cst_24 {dimension_numbers = #tpu.dot_dimension_numbers<[1], [0], [0], [1], [0, 0, 1, 1], [], []>} : vector<32x128xbf16>, vector<128x128xbf16>, vector<32x128xf32> -> vector<32x128xf32>
    %c2_25 = arith.constant 2 : index
    %c0_26 = arith.constant 0 : index
    %31 = vector.load %arg4[%c2_25, %c0_26] : memref<8x128xf32, #tpu.memory_space<vmem>>, vector<1x128xf32>
    %32 = vector.broadcast %31 : vector<1x128xf32> to vector<32x128xf32>
    %33 = arith.addf %30, %32 : vector<32x128xf32>
    %cst_27 = arith.constant 0.000000e+00 : f32
    %34 = vector.broadcast %cst_27 : f32 to vector<32x128xf32>
    %35 = arith.maximumf %33, %34 : vector<32x128xf32>
    %36 = arith.truncf %35 : vector<32x128xf32> to vector<32x128xbf16>
    %c0_28 = arith.constant 0 : index
    %c0_29 = arith.constant 0 : index
    %37 = vector.load %arg0[%c0_28, %c0_29] : memref<32x32xbf16, #tpu.memory_space<vmem>>, vector<32x32xbf16>
    %cst_30 = arith.constant dense<0.000000e+00> : vector<32x128xf32>
    %38 = tpu.matmul %37, %36, %cst_30 {dimension_numbers = #tpu.dot_dimension_numbers<[1], [0], [0], [1], [0, 0, 1, 1], [], []>} : vector<32x32xbf16>, vector<32x128xbf16>, vector<32x128xf32> -> vector<32x128xf32>
    %39 = arith.truncf %38 : vector<32x128xf32> to vector<32x128xbf16>
    %c3 = arith.constant 3 : index
    %c0_31 = arith.constant 0 : index
    %c0_32 = arith.constant 0 : index
    %40 = vector.load %arg3[%c3, %c0_31, %c0_32] : memref<7x128x128xbf16, #tpu.memory_space<vmem>>, vector<1x128x128xbf16>
    %41 = vector.shape_cast %40 : vector<1x128x128xbf16> to vector<128x128xbf16>
    %cst_33 = arith.constant dense<0.000000e+00> : vector<32x128xf32>
    %42 = tpu.matmul %39, %41, %cst_33 {dimension_numbers = #tpu.dot_dimension_numbers<[1], [0], [0], [1], [0, 0, 1, 1], [], []>} : vector<32x128xbf16>, vector<128x128xbf16>, vector<32x128xf32> -> vector<32x128xf32>
    %c3_34 = arith.constant 3 : index
    %c0_35 = arith.constant 0 : index
    %43 = vector.load %arg4[%c3_34, %c0_35] : memref<8x128xf32, #tpu.memory_space<vmem>>, vector<1x128xf32>
    %44 = vector.broadcast %43 : vector<1x128xf32> to vector<32x128xf32>
    %45 = arith.addf %42, %44 : vector<32x128xf32>
    %cst_36 = arith.constant 0.000000e+00 : f32
    %46 = vector.broadcast %cst_36 : f32 to vector<32x128xf32>
    %47 = arith.maximumf %45, %46 : vector<32x128xf32>
    %48 = arith.truncf %47 : vector<32x128xf32> to vector<32x128xbf16>
    %c0_37 = arith.constant 0 : index
    %c0_38 = arith.constant 0 : index
    %49 = vector.load %arg0[%c0_37, %c0_38] : memref<32x32xbf16, #tpu.memory_space<vmem>>, vector<32x32xbf16>
    %cst_39 = arith.constant dense<0.000000e+00> : vector<32x128xf32>
    %50 = tpu.matmul %49, %48, %cst_39 {dimension_numbers = #tpu.dot_dimension_numbers<[1], [0], [0], [1], [0, 0, 1, 1], [], []>} : vector<32x32xbf16>, vector<32x128xbf16>, vector<32x128xf32> -> vector<32x128xf32>
    %51 = arith.truncf %50 : vector<32x128xf32> to vector<32x128xbf16>
    %c4 = arith.constant 4 : index
    %c0_40 = arith.constant 0 : index
    %c0_41 = arith.constant 0 : index
    %52 = vector.load %arg3[%c4, %c0_40, %c0_41] : memref<7x128x128xbf16, #tpu.memory_space<vmem>>, vector<1x128x128xbf16>
    %53 = vector.shape_cast %52 : vector<1x128x128xbf16> to vector<128x128xbf16>
    %cst_42 = arith.constant dense<0.000000e+00> : vector<32x128xf32>
    %54 = tpu.matmul %51, %53, %cst_42 {dimension_numbers = #tpu.dot_dimension_numbers<[1], [0], [0], [1], [0, 0, 1, 1], [], []>} : vector<32x128xbf16>, vector<128x128xbf16>, vector<32x128xf32> -> vector<32x128xf32>
    %c4_43 = arith.constant 4 : index
    %c0_44 = arith.constant 0 : index
    %55 = vector.load %arg4[%c4_43, %c0_44] : memref<8x128xf32, #tpu.memory_space<vmem>>, vector<1x128xf32>
    %56 = vector.broadcast %55 : vector<1x128xf32> to vector<32x128xf32>
    %57 = arith.addf %54, %56 : vector<32x128xf32>
    %cst_45 = arith.constant 0.000000e+00 : f32
    %58 = vector.broadcast %cst_45 : f32 to vector<32x128xf32>
    %59 = arith.maximumf %57, %58 : vector<32x128xf32>
    %60 = arith.truncf %59 : vector<32x128xf32> to vector<32x128xbf16>
    %61 = arith.extf %60 : vector<32x128xbf16> to vector<32x128xf32>
    %c0_46 = arith.constant 0 : index
    %c0_47 = arith.constant 0 : index
    %62 = vector.load %arg2[%c0_46, %c0_47] : memref<32x2xf32, #tpu.memory_space<vmem>>, vector<32x1xf32>
    %63 = vector.broadcast %62 : vector<32x1xf32> to vector<32x128xf32>
    %64 = arith.mulf %61, %63 : vector<32x128xf32>
    %cst_48 = arith.constant dense<0xFF800000> : vector<128xf32>
    %65 = vector.multi_reduction <maximumf>, %64, %cst_48 [0] : vector<32x128xf32> to vector<128xf32>
    %66 = vector.shape_cast %65 : vector<128xf32> to vector<1x128xf32>
    %c0_49 = arith.constant 0 : index
    %c0_50 = arith.constant 0 : index
    %67 = vector.load %arg6[%c0_49, %c0_50] : memref<2x128xf32, #tpu.memory_space<vmem>>, vector<1x128xf32>
    tpu.vector_store %arg6[%c0_49, %c0_50], %66 {strides = array<i32>} : memref<2x128xf32, #tpu.memory_space<vmem>>, vector<1x128xf32>,
    %c0_51 = arith.constant 0 : index
    %c1_52 = arith.constant 1 : index
    %68 = vector.load %arg2[%c0_51, %c1_52] : memref<32x2xf32, #tpu.memory_space<vmem>>, vector<32x1xf32>
    %69 = vector.broadcast %68 : vector<32x1xf32> to vector<32x128xf32>
    %70 = arith.mulf %61, %69 : vector<32x128xf32>
    %cst_53 = arith.constant dense<0xFF800000> : vector<128xf32>
    %71 = vector.multi_reduction <maximumf>, %70, %cst_53 [0] : vector<32x128xf32> to vector<128xf32>
    %72 = vector.shape_cast %71 : vector<128xf32> to vector<1x128xf32>
    %c1_54 = arith.constant 1 : index
    %c0_55 = arith.constant 0 : index
    %73 = vector.load %arg6[%c1_54, %c0_55] : memref<2x128xf32, #tpu.memory_space<vmem>>, vector<1x128xf32>
    tpu.vector_store %arg6[%c1_54, %c0_55], %72 {strides = array<i32>} : memref<2x128xf32, #tpu.memory_space<vmem>>, vector<1x128xf32>,
    %c0_56 = arith.constant 0 : index
    %c0_57 = arith.constant 0 : index
    %74 = vector.load %arg6[%c0_56, %c0_57] : memref<2x128xf32, #tpu.memory_space<vmem>>, vector<2x128xf32>
    %75 = arith.truncf %74 : vector<2x128xf32> to vector<2x128xbf16>
    %c5 = arith.constant 5 : index
    %c0_58 = arith.constant 0 : index
    %c0_59 = arith.constant 0 : index
    %76 = vector.load %arg3[%c5, %c0_58, %c0_59] : memref<7x128x128xbf16, #tpu.memory_space<vmem>>, vector<1x128x128xbf16>
    %77 = vector.shape_cast %76 : vector<1x128x128xbf16> to vector<128x128xbf16>
    %cst_60 = arith.constant dense<0.000000e+00> : vector<2x128xf32>
    %78 = tpu.matmul %75, %77, %cst_60 {dimension_numbers = #tpu.dot_dimension_numbers<[1], [0], [0], [1], [0, 0, 1, 1], [], []>} : vector<2x128xbf16>, vector<128x128xbf16>, vector<2x128xf32> -> vector<2x128xf32>
    %c5_61 = arith.constant 5 : index
    %c0_62 = arith.constant 0 : index
    %79 = vector.load %arg4[%c5_61, %c0_62] : memref<8x128xf32, #tpu.memory_space<vmem>>, vector<1x128xf32>
    %80 = vector.broadcast %79 : vector<1x128xf32> to vector<2x128xf32>
    %81 = arith.addf %78, %80 : vector<2x128xf32>
    %cst_63 = arith.constant 0.000000e+00 : f32
    %82 = vector.broadcast %cst_63 : f32 to vector<2x128xf32>
    %83 = arith.maximumf %81, %82 : vector<2x128xf32>
    %84 = arith.truncf %83 : vector<2x128xf32> to vector<2x128xbf16>
    %c6 = arith.constant 6 : index
    %c0_64 = arith.constant 0 : index
    %c0_65 = arith.constant 0 : index
    %85 = vector.load %arg3[%c6, %c0_64, %c0_65] : memref<7x128x128xbf16, #tpu.memory_space<vmem>>, vector<1x128x128xbf16>
    %86 = vector.shape_cast %85 : vector<1x128x128xbf16> to vector<128x128xbf16>
    %cst_66 = arith.constant dense<0.000000e+00> : vector<2x128xf32>
    %87 = tpu.matmul %84, %86, %cst_66 {dimension_numbers = #tpu.dot_dimension_numbers<[1], [0], [0], [1], [0, 0, 1, 1], [], []>} : vector<2x128xbf16>, vector<128x128xbf16>, vector<2x128xf32> -> vector<2x128xf32>
    %c6_67 = arith.constant 6 : index
    %c0_68 = arith.constant 0 : index
    %88 = vector.load %arg4[%c6_67, %c0_68] : memref<8x128xf32, #tpu.memory_space<vmem>>, vector<1x128xf32>
    %89 = vector.broadcast %88 : vector<1x128xf32> to vector<2x128xf32>
    %90 = arith.addf %87, %89 : vector<2x128xf32>
    %c0_69 = arith.constant 0 : index
    %c0_70 = arith.constant 0 : index
    %91 = vector.load %arg5[%c0_69, %c0_70] : memref<2x128xf32, #tpu.memory_space<vmem>>, vector<2x128xf32>
    tpu.vector_store %arg5[%c0_69, %c0_70], %90 {strides = array<i32>} : memref<2x128xf32, #tpu.memory_space<vmem>>, vector<2x128xf32>,
    return
  }
}

</mosaic_0001>

<llo_original>
// kernel: tpu_custom_call.1
$region0: #{tpu_custom_call.1}
  #allocation0 [shape = 'u32[]', space=smem, size = 0x4, offset = 0x4, fixed_abs, tag = 'smem constant byte address 0x4 - core index']
  #allocation1 [shape = 'u32[144,128]{1,0:T(1,128)}', space=vmem, size = 0x12000, scoped, tag = 'internal scratch']
  #allocation2 [shape = 'f32[2,128]{1,0:T(2,128)}', space=vmem, size = 0x400, scoped, tag = 'scratch operand']
  %s0 = inlined_call_operand.vmem [shape: bf16[32,32], index: 0, kind: input, shape index: {}]
  %s1 = inlined_call_operand.vmem [shape: bf16[32,128], index: 1, kind: input, shape index: {}]
  %s2 = inlined_call_operand.vmem [shape: f32[32,2], index: 2, kind: input, shape index: {}]
  %s3 = inlined_call_operand.hbm [shape: bf16[7,128,128], index: 3, kind: input, shape index: {}]
  %s4 = inlined_call_operand.vmem [shape: f32[8,128], index: 4, kind: input, shape index: {}]
  %s5 = inlined_call_operand.hbm [shape: f32[2,128], index: 5, kind: output, shape index: {}]
  %s6 = sld [smem:[#allocation0]]
  $region34: #{tpu_custom_call.1} parent=0
    _
  %s8 = ssub.s32 1, %s6
  %s9 = scalar_select 0, %s8, %s6
  $region1: #{tpu_custom_call.1} parent=0
    #allocation3 [shape = 'u8[229376]{0}', space=vmem, size = 0x38000, scoped, tag = 'input window, operand 3, single buffered']
    #allocation4 [shape = 's32[1]{0}', space=sflag, size = 0x4, scoped, tag = 'scoped memory for tpu_custom_call.1']
    #allocation5 [shape = 's32[1]{0}', space=sflag, size = 0x4, scoped, tag = 'scoped memory for tpu_custom_call.1']
    #allocation6 [shape = 'u8[1024]{0}', space=vmem, size = 0x400, scoped, tag = 'output window, operand 0, single buffered']
    %10 = vsyncpa [#allocation4], 0
    %11 = vsyncpa [#allocation5], 0
    // Predicated region
    $region2: #{tpu_custom_call.1} parent=1 // pred_check
      _
    $region3: #{tpu_custom_call.1} parent=1 // pred_check_branch
      %13 = sbr.rel (0) target = $region5
    $region4: #{tpu_custom_call.1} parent=1 // pred_region
      _
    $region5: #{tpu_custom_call.1} parent=1 // pred_fallthru
      _
    // Predicated region
    $region6: #{tpu_custom_call.1} parent=1 // pred_check
      _
    $region7: #{tpu_custom_call.1} parent=1 // pred_check_branch
      %15 = sbr.rel (0) target = $region9
    $region8: #{tpu_custom_call.1} parent=1 // pred_region
      _
    $region9: #{tpu_custom_call.1} parent=1 // pred_fallthru
      _
    // Predicated region
    $region10: #{tpu_custom_call.1} parent=1 // pred_check
      _
    $region11: #{tpu_custom_call.1} parent=1 // pred_check_branch
      %17 = sbr.rel (0) target = $region13
    $region12: #{tpu_custom_call.1} parent=1 // pred_region
      _
    $region13: #{tpu_custom_call.1} parent=1 // pred_fallthru
      _
    // Predicated region
    $region14: #{tpu_custom_call.1} parent=1 // pred_check
      _
    $region15: #{tpu_custom_call.1} parent=1 // pred_check_branch
      %19 = sbr.rel (0) target = $region17
    $region16: #{tpu_custom_call.1} parent=1 // pred_region
      %s21 = ssub.s32 7168, 7168
      %22 = vsyncadd [#allocation4], %s21
      %s23 = sshll.u32 [#allocation3], 4
      %s24 = int_to_ptr.vmem [resolvable:$true] %s23
      %29 = dma.hbm_to_vmem [thread:$0]  %s3, 7168, %s24, [#allocation4], 64, 64, 4
    $region17: #{tpu_custom_call.1} parent=1 // pred_fallthru
      _
    // Predicated region
    $region18: #{tpu_custom_call.1} parent=1 // pred_check
      _
    $region19: #{tpu_custom_call.1} parent=1 // pred_check_branch
      %31 = sbr.rel (0) target = $region21
    $region20: #{tpu_custom_call.1} parent=1 // pred_region
      _
    $region21: #{tpu_custom_call.1} parent=1 // pred_fallthru
      _
    // Predicated region
    $region22: #{tpu_custom_call.1} parent=1 // pred_check
      _
    $region23: #{tpu_custom_call.1} parent=1 // pred_check_branch
      %33 = sbr.rel (0) target = $region25
    $region24: #{tpu_custom_call.1} parent=1 // pred_region
      %34 = dma.done [#allocation4], 7168
    $region25: #{tpu_custom_call.1} parent=1 // pred_fallthru
      _
    %v36 = vld [vmem:[%s1] sm:$0xf]
    %v37 = vld [vmem:[%s1 + $0x4] sm:$0xf]
    %v38 = vld [vmem:[%s1 + $0x8] sm:$0xf]
    %v39 = vld [vmem:[%s1 + $0xc] sm:$0xf]
    %v40 = vld [vmem:[%s0] sm:$0xf]
    %v41 = vld [vmem:[%s0 + $0x4] sm:$0xf]
    %v42 = vld [vmem:[%s0 + $0x8] sm:$0xf]
    %v43 = vld [vmem:[%s0 + $0xc] sm:$0xf]
    %v48 = vunpack.c.l.b16 %v40
    %v49 = vunpack.c.l.b16 %v41
    %v50 = vunpack.c.l.b16 %v42
    %v51 = vunpack.c.l.b16 %v43
    %v52 = vpack.c.b16 %v49, %v48
    %v53 = vpack.c.b16 %v51, %v50
    %v58 = vunpack.c.l.b16 %v36
    %v59 = vunpack.c.l.b16 %v37
    %v60 = vunpack.c.l.b16 %v38
    %v61 = vunpack.c.l.b16 %v39
    %v62 = vpack.c.b16 %v59, %v58
    %v63 = vpack.c.b16 %v61, %v60
    %vm66 = vcmask 261120
    %v68 = vsel %vm66, %v52, 0
    %v71 = vsel %vm66, %v53, 0
    %73 = vmatprep.subr.bf16.mxu0 0
    %74 = vmatpush1.bf16.msra.mxu0 %v62
    %75 = vmatprep.subr.bf16.mxu0 0
    %76 = vmatpush1.bf16.msra.mxu0 %v63
    %77 = vmatprep.subr.bf16.mxu0 0
    %78 = vmatpush1.bf16.msra.mxu0 0
    %79 = vmatprep.subr.bf16.mxu0 0
    %80 = vmatpush1.bf16.msra.mxu0 0
    %81 = vmatprep.subr.bf16.mxu0 0
    %82 = vmatpush1.bf16.msra.mxu0 0
    %83 = vmatprep.subr.bf16.mxu0 0
    %84 = vmatpush1.bf16.msra.mxu0 0
    %85 = vmatprep.subr.bf16.mxu0 0
    %86 = vmatpush1.bf16.msra.mxu0 0
    %87 = vmatprep.subr.bf16.mxu0 0
    %88 = vmatpush1.bf16.msra.mxu0 0
    %89 = vmatprep.subr.bf16.mxu0 0
    %90 = vmatpush1.bf16.msra.mxu0 0
    %91 = vmatprep.subr.bf16.mxu0 0
    %92 = vmatpush1.bf16.msra.mxu0 0
    %93 = vmatprep.subr.bf16.mxu0 0
    %94 = vmatpush1.bf16.msra.mxu0 0
    %95 = vmatprep.subr.bf16.mxu0 0
    %96 = vmatpush1.bf16.msra.mxu0 0
    %97 = vmatprep.subr.bf16.mxu0 0
    %98 = vmatpush1.bf16.msra.mxu0 0
    %99 = vmatprep.subr.bf16.mxu0 0
    %100 = vmatpush1.bf16.msra.mxu0 0
    %101 = vmatprep.subr.bf16.mxu0 0
    %102 = vmatpush1.bf16.msra.mxu0 0
    %103 = vmatprep.subr.bf16.mxu0 0
    %104 = vmatpush1.bf16.msra.mxu0 0
    %105 = vmatprep.mubr.bf16.mxu0 0
    %106 = vmatmul.mubr.bf16.gmra.mrb[0].mxu0 %v68
    %v107 = vpop.f32.mrb[0].mxu0
    %v108 = vadd.f32 0.0, %v107
    %v109 = vpop.f32.mrb[0].mxu0
    %v110 = vpop.f32.mrb[0].mxu0
    %v111 = vadd.f32 0.0, %v110
    %v112 = vpop.f32.mrb[0].mxu0
    %113 = vmatprep.mubr.bf16.mxu0 0
    %114 = vmatmul.mubr.bf16.gmra.mrb[0].mxu0 %v71
    %v115 = vpop.f32.mrb[0].mxu0
    %v116 = vadd.f32 0.0, %v115
    %v117 = vpop.f32.mrb[0].mxu0
    %v118 = vpop.f32.mrb[0].mxu0
    %v119 = vadd.f32 0.0, %v118
    %v120 = vpop.f32.mrb[0].mxu0
    %121 = vdwg.mxu0
    %v122 = vpack.c.bf16 %v111, %v108
    %v123 = vpack.c.bf16 %v119, %v116
    %v124 = vld [vmem:[#allocation3] sm:$0xf]
    %v125 = vld [vmem:[#allocation3 + $0x4] sm:$0xf]
    %v126 = vld [vmem:[#allocation3 + $0x8] sm:$0xf]
    %v127 = vld [vmem:[#allocation3 + $0xc] sm:$0xf]
    %v128 = vld [vmem:[#allocation3 + $0x10] sm:$0xf]
    %v129 = vld [vmem:[#allocation3 + $0x14] sm:$0xf]
    %v130 = vld [vmem:[#allocation3 + $0x18] sm:$0xf]
    %v131 = vld [vmem:[#allocation3 + $0x1c] sm:$0xf]
    %v132 = vld [vmem:[#allocation3 + $0x20] sm:$0xf]
    %v133 = vld [vmem:[#allocation3 + $0x24] sm:$0xf]
    %v134 = vld [vmem:[#allocation3 + $0x28] sm:$0xf]
    %v135 = vld [vmem:[#allocation3 + $0x2c] sm:$0xf]
    %v136 = vld [vmem:[#allocation3 + $0x30] sm:$0xf]
    %v137 = vld [vmem:[#allocation3 + $0x34] sm:$0xf]
    %v138 = vld [vmem:[#allocation3 + $0x38] sm:$0xf]
    %v139 = vld [vmem:[#allocation3 + $0x3c] sm:$0xf]
    %v140 = vld [vmem:[%s4] sm:$0x1]
    %v141 = vlaneseq
    %v142 = vshrl.u32 %v141, 7
    %v143 = vsub.s32 0, %v142
    %v144 = vrot.slane %v140, %v143
    %v161 = vunpack.c.l.b16 %v124
    %v162 = vunpack.c.l.b16 %v125
    %v163 = vunpack.c.l.b16 %v126
    %v164 = vunpack.c.l.b16 %v127
    %v165 = vunpack.c.l.b16 %v128
    %v166 = vunpack.c.l.b16 %v129
    %v167 = vunpack.c.l.b16 %v130
    %v168 = vunpack.c.l.b16 %v131
    %v169 = vunpack.c.l.b16 %v132
    %v170 = vunpack.c.l.b16 %v133
    %v171 = vunpack.c.l.b16 %v134
    %v172 = vunpack.c.l.b16 %v135
    %v173 = vunpack.c.l.b16 %v136
    %v174 = vunpack.c.l.b16 %v137
    %v175 = vunpack.c.l.b16 %v138
    %v176 = vunpack.c.l.b16 %v139
    %v177 = vpack.c.b16 %v162, %v161
    %v178 = vpack.c.b16 %v164, %v163
    %v179 = vpack.c.b16 %v166, %v165
    %v180 = vpack.c.b16 %v168, %v167
    %v181 = vpack.c.b16 %v170, %v169
    %v182 = vpack.c.b16 %v172, %v171
    %v183 = vpack.c.b16 %v174, %v173
    %v184 = vpack.c.b16 %v176, %v175
    %193 = vmatprep.subr.bf16.mxu0 0
    %194 = vmatpush1.bf16.msra.mxu0 %v177
    %195 = vmatprep.subr.bf16.mxu0 0
    %196 = vmatpush1.bf16.msra.mxu0 %v178
    %197 = vmatprep.subr.bf16.mxu0 0
    %198 = vmatpush1.bf16.msra.mxu0 %v179
    %199 = vmatprep.subr.bf16.mxu0 0
    %200 = vmatpush1.bf16.msra.mxu0 %v180
    %201 = vmatprep.subr.bf16.mxu0 0
    %202 = vmatpush1.bf16.msra.mxu0 %v181
    %203 = vmatprep.subr.bf16.mxu0 0
    %204 = vmatpush1.bf16.msra.mxu0 %v182
    %205 = vmatprep.subr.bf16.mxu0 0
    %206 = vmatpush1.bf16.msra.mxu0 %v183
    %207 = vmatprep.subr.bf16.mxu0 0
    %208 = vmatpush1.bf16.msra.mxu0 %v184
    %209 = vmatprep.subr.bf16.mxu0 0
    %210 = vmatpush1.bf16.msra.mxu0 0
    %211 = vmatprep.subr.bf16.mxu0 0
    %212 = vmatpush1.bf16.msra.mxu0 0
    %213 = vmatprep.subr.bf16.mxu0 0
    %214 = vmatpush1.bf16.msra.mxu0 0
    %215 = vmatprep.subr.bf16.mxu0 0
    %216 = vmatpush1.bf16.msra.mxu0 0
    %217 = vmatprep.subr.bf16.mxu0 0
    %218 = vmatpush1.bf16.msra.mxu0 0
    %219 = vmatprep.subr.bf16.mxu0 0
    %220 = vmatpush1.bf16.msra.mxu0 0
    %221 = vmatprep.subr.bf16.mxu0 0
    %222 = vmatpush1.bf16.msra.mxu0 0
    %223 = vmatprep.subr.bf16.mxu0 0
    %224 = vmatpush1.bf16.msra.mxu0 0
    %225 = vmatprep.mubr.bf16.mxu0 0
    %226 = vmatmul.mubr.bf16.gmra.mrb[0].mxu0 %v122
    %v227 = vpop.f32.mrb[0].mxu0
    %v228 = vadd.f32 %v144, %v227
    %v229 = vpop.f32.mrb[0].mxu0
    %v230 = vpop.f32.mrb[0].mxu0
    %v231 = vadd.f32 %v144, %v230
    %v232 = vpop.f32.mrb[0].mxu0
    %233 = vmatprep.mubr.bf16.mxu0 0
    %234 = vmatmul.mubr.bf16.gmra.mrb[0].mxu0 %v123
    %v235 = vpop.f32.mrb[0].mxu0
    %v236 = vadd.f32 %v144, %v235
    %v237 = vpop.f32.mrb[0].mxu0
    %v238 = vpop.f32.mrb[0].mxu0
    %v239 = vadd.f32 %v144, %v238
    %v240 = vpop.f32.mrb[0].mxu0
    %241 = vdwg.mxu0
    %v242 = vmax.f32 %v228, 0.0
    %v243 = vmax.f32 %v231, 0.0
    %v244 = vmax.f32 %v236, 0.0
    %v245 = vmax.f32 %v239, 0.0
    %v246 = vpack.c.bf16 %v243, %v242
    %v247 = vpack.c.bf16 %v245, %v244
    %248 = vmatprep.subr.bf16.mxu0 0
    %249 = vmatpush1.bf16.msra.mxu0 %v246
    %250 = vmatprep.subr.bf16.mxu0 0
    %251 = vmatpush1.bf16.msra.mxu0 %v247
    %252 = vmatprep.subr.bf16.mxu0 0
    %253 = vmatpush1.bf16.msra.mxu0 0
    %254 = vmatprep.subr.bf16.mxu0 0
    %255 = vmatpush1.bf16.msra.mxu0 0
    %256 = vmatprep.subr.bf16.mxu0 0
    %257 = vmatpush1.bf16.msra.mxu0 0
    %258 = vmatprep.subr.bf16.mxu0 0
    %259 = vmatpush1.bf16.msra.mxu0 0
    %260 = vmatprep.subr.bf16.mxu0 0
    %261 = vmatpush1.bf16.msra.mxu0 0
    %262 = vmatprep.subr.bf16.mxu0 0
    %263 = vmatpush1.bf16.msra.mxu0 0
    %264 = vmatprep.subr.bf16.mxu0 0
    %265 = vmatpush1.bf16.msra.mxu0 0
    %266 = vmatprep.subr.bf16.mxu0 0
    %267 = vmatpush1.bf16.msra.mxu0 0
    %268 = vmatprep.subr.bf16.mxu0 0
    %269 = vmatpush1.bf16.msra.mxu0 0
    %270 = vmatprep.subr.bf16.mxu0 0
    %271 = vmatpush1.bf16.msra.mxu0 0
    %272 = vmatprep.subr.bf16.mxu0 0
    %273 = vmatpush1.bf16.msra.mxu0 0
    %274 = vmatprep.subr.bf16.mxu0 0
    %275 = vmatpush1.bf16.msra.mxu0 0
    %276 = vmatprep.subr.bf16.mxu0 0
    %277 = vmatpush1.bf16.msra.mxu0 0
    %278 = vmatprep.subr.bf16.mxu0 0
    %279 = vmatpush1.bf16.msra.mxu0 0
    %280 = vmatprep.mubr.bf16.mxu0 0
    %281 = vmatmul.mubr.bf16.gmra.mrb[0].mxu0 %v68
    %v282 = vpop.f32.mrb[0].mxu0
    %v283 = vadd.f32 0.0, %v282
    %v284 = vpop.f32.mrb[0].mxu0
    %v285 = vpop.f32.mrb[0].mxu0
    %v286 = vadd.f32 0.0, %v285
    %v287 = vpop.f32.mrb[0].mxu0
    %288 = vmatprep.mubr.bf16.mxu0 0
    %289 = vmatmul.mubr.bf16.gmra.mrb[0].mxu0 %v71
    %v290 = vpop.f32.mrb[0].mxu0
    %v291 = vadd.f32 0.0, %v290
    %v292 = vpop.f32.mrb[0].mxu0
    %v293 = vpop.f32.mrb[0].mxu0
    %v294 = vadd.f32 0.0, %v293
    %v295 = vpop.f32.mrb[0].mxu0
    %296 = vdwg.mxu0
    %v297 = vpack.c.bf16 %v286, %v283
    %v298 = vpack.c.bf16 %v294, %v291
    %s299 = scalar_lea.vmem [#allocation3], 64
    %v300 = vld [vmem:[%s299] sm:$0xf]
    %v301 = vld [vmem:[%s299 + $0x4] sm:$0xf]
    %v302 = vld [vmem:[%s299 + $0x8] sm:$0xf]
    %v303 = vld [vmem:[%s299 + $0xc] sm:$0xf]
    %v304 = vld [vmem:[%s299 + $0x10] sm:$0xf]
    %v305 = vld [vmem:[%s299 + $0x14] sm:$0xf]
    %v306 = vld [vmem:[%s299 + $0x18] sm:$0xf]
    %v307 = vld [vmem:[%s299 + $0x1c] sm:$0xf]
    %v308 = vld [vmem:[%s299 + $0x20] sm:$0xf]
    %v309 = vld [vmem:[%s299 + $0x24] sm:$0xf]
    %v310 = vld [vmem:[%s299 + $0x28] sm:$0xf]
    %v311 = vld [vmem:[%s299 + $0x2c] sm:$0xf]
    %v312 = vld [vmem:[%s299 + $0x30] sm:$0xf]
    %v313 = vld [vmem:[%s299 + $0x34] sm:$0xf]
    %v314 = vld [vmem:[%s299 + $0x38] sm:$0xf]
    %v315 = vld [vmem:[%s299 + $0x3c] sm:$0xf]
    %v316 = vld [vmem:[%s4 + $0x1] sm:$0x1]
    %v317 = vlaneseq
    %v318 = vshrl.u32 %v317, 7
    %v319 = vsub.s32 0, %v318
    %v320 = vrot.slane %v316, %v319
    %v337 = vunpack.c.l.b16 %v300
    %v338 = vunpack.c.l.b16 %v301
    %v339 = vunpack.c.l.b16 %v302
    %v340 = vunpack.c.l.b16 %v303
    %v341 = vunpack.c.l.b16 %v304
    %v342 = vunpack.c.l.b16 %v305
    %v343 = vunpack.c.l.b16 %v306
    %v344 = vunpack.c.l.b16 %v307
    %v345 = vunpack.c.l.b16 %v308
    %v346 = vunpack.c.l.b16 %v309
    %v347 = vunpack.c.l.b16 %v310
    %v348 = vunpack.c.l.b16 %v311
    %v349 = vunpack.c.l.b16 %v312
    %v350 = vunpack.c.l.b16 %v313
    %v351 = vunpack.c.l.b16 %v314
    %v352 = vunpack.c.l.b16 %v315
    %v353 = vpack.c.b16 %v338, %v337
    %v354 = vpack.c.b16 %v340, %v339
    %v355 = vpack.c.b16 %v342, %v341
    %v356 = vpack.c.b16 %v344, %v343
    %v357 = vpack.c.b16 %v346, %v345
    %v358 = vpack.c.b16 %v348, %v347
    %v359 = vpack.c.b16 %v350, %v349
    %v360 = vpack.c.b16 %v352, %v351
    %369 = vmatprep.subr.bf16.mxu0 0
    %370 = vmatpush1.bf16.msra.mxu0 %v353
    %371 = vmatprep.subr.bf16.mxu0 0
    %372 = vmatpush1.bf16.msra.mxu0 %v354
    %373 = vmatprep.subr.bf16.mxu0 0
    %374 = vmatpush1.bf16.msra.mxu0 %v355
    %375 = vmatprep.subr.bf16.mxu0 0
    %376 = vmatpush1.bf16.msra.mxu0 %v356
    %377 = vmatprep.subr.bf16.mxu0 0
    %378 = vmatpush1.bf16.msra.mxu0 %v357
    %379 = vmatprep.subr.bf16.mxu0 0
    %380 = vmatpush1.bf16.msra.mxu0 %v358
    %381 = vmatprep.subr.bf16.mxu0 0
    %382 = vmatpush1.bf16.msra.mxu0 %v359
    %383 = vmatprep.subr.bf16.mxu0 0
    %384 = vmatpush1.bf16.msra.mxu0 %v360
    %385 = vmatprep.subr.bf16.mxu0 0
    %386 = vmatpush1.bf16.msra.mxu0 0
    %387 = vmatprep.subr.bf16.mxu0 0
    %388 = vmatpush1.bf16.msra.mxu0 0
    %389 = vmatprep.subr.bf16.mxu0 0
    %390 = vmatpush1.bf16.msra.mxu0 0
    %391 = vmatprep.subr.bf16.mxu0 0
    %392 = vmatpush1.bf16.msra.mxu0 0
    %393 = vmatprep.subr.bf16.mxu0 0
    %394 = vmatpush1.bf16.msra.mxu0 0
    %395 = vmatprep.subr.bf16.mxu0 0
    %396 = vmatpush1.bf16.msra.mxu0 0
    %397 = vmatprep.subr.bf16.mxu0 0
    %398 = vmatpush1.bf16.msra.mxu0 0
    %399 = vmatprep.subr.bf16.mxu0 0
    %400 = vmatpush1.bf16.msra.mxu0 0
    %401 = vmatprep.mubr.bf16.mxu0 0
    %402 = vmatmul.mubr.bf16.gmra.mrb[0].mxu0 %v297
    %v403 = vpop.f32.mrb[0].mxu0
    %v404 = vadd.f32 %v320, %v403
    %v405 = vpop.f32.mrb[0].mxu0
    %v406 = vpop.f32.mrb[0].mxu0
    %v407 = vadd.f32 %v320, %v406
    %v408 = vpop.f32.mrb[0].mxu0
    %409 = vmatprep.mubr.bf16.mxu0 0
    %410 = vmatmul.mubr.bf16.gmra.mrb[0].mxu0 %v298
    %v411 = vpop.f32.mrb[0].mxu0
    %v412 = vadd.f32 %v320, %v411
    %v413 = vpop.f32.mrb[0].mxu0
    %v414 = vpop.f32.mrb[0].mxu0
    %v415 = vadd.f32 %v320, %v414
    %v416 = vpop.f32.mrb[0].mxu0
    %417 = vdwg.mxu0
    %v418 = vmax.f32 %v404, 0.0
    %v419 = vmax.f32 %v407, 0.0
    %v420 = vmax.f32 %v412, 0.0
    %v421 = vmax.f32 %v415, 0.0
    %v422 = vpack.c.bf16 %v419, %v418
    %v423 = vpack.c.bf16 %v421, %v420
    %424 = vmatprep.subr.bf16.mxu0 0
    %425 = vmatpush1.bf16.msra.mxu0 %v422
    %426 = vmatprep.subr.bf16.mxu0 0
    %427 = vmatpush1.bf16.msra.mxu0 %v423
    %428 = vmatprep.subr.bf16.mxu0 0
    %429 = vmatpush1.bf16.msra.mxu0 0
    %430 = vmatprep.subr.bf16.mxu0 0
    %431 = vmatpush1.bf16.msra.mxu0 0
    %432 = vmatprep.subr.bf16.mxu0 0
    %433 = vmatpush1.bf16.msra.mxu0 0
    %434 = vmatprep.subr.bf16.mxu0 0
    %435 = vmatpush1.bf16.msra.mxu0 0
    %436 = vmatprep.subr.bf16.mxu0 0
    %437 = vmatpush1.bf16.msra.mxu0 0
    %438 = vmatprep.subr.bf16.mxu0 0
    %439 = vmatpush1.bf16.msra.mxu0 0
    %440 = vmatprep.subr.bf16.mxu0 0
    %441 = vmatpush1.bf16.msra.mxu0 0
    %442 = vmatprep.subr.bf16.mxu0 0
    %443 = vmatpush1.bf16.msra.mxu0 0
    %444 = vmatprep.subr.bf16.mxu0 0
    %445 = vmatpush1.bf16.msra.mxu0 0
    %446 = vmatprep.subr.bf16.mxu0 0
    %447 = vmatpush1.bf16.msra.mxu0 0
    %448 = vmatprep.subr.bf16.mxu0 0
    %449 = vmatpush1.bf16.msra.mxu0 0
    %450 = vmatprep.subr.bf16.mxu0 0
    %451 = vmatpush1.bf16.msra.mxu0 0
    %452 = vmatprep.subr.bf16.mxu0 0
    %453 = vmatpush1.bf16.msra.mxu0 0
    %454 = vmatprep.subr.bf16.mxu0 0
    %455 = vmatpush1.bf16.msra.mxu0 0
    %456 = vmatprep.mubr.bf16.mxu0 0
    %457 = vmatmul.mubr.bf16.gmra.mrb[0].mxu0 %v68
    %v458 = vpop.f32.mrb[0].mxu0
    %v459 = vadd.f32 0.0, %v458
    %v460 = vpop.f32.mrb[0].mxu0
    %v461 = vpop.f32.mrb[0].mxu0
    %v462 = vadd.f32 0.0, %v461
    %v463 = vpop.f32.mrb[0].mxu0
    %464 = vmatprep.mubr.bf16.mxu0 0
    %465 = vmatmul.mubr.bf16.gmra.mrb[0].mxu0 %v71
    %v466 = vpop.f32.mrb[0].mxu0
    %v467 = vadd.f32 0.0, %v466
    %v468 = vpop.f32.mrb[0].mxu0
    %v469 = vpop.f32.mrb[0].mxu0
    %v470 = vadd.f32 0.0, %v469
    %v471 = vpop.f32.mrb[0].mxu0
    %472 = vdwg.mxu0
    %v473 = vpack.c.bf16 %v462, %v459
    %v474 = vpack.c.bf16 %v470, %v467
    %s475 = scalar_lea.vmem [#allocation3], 128
    %v476 = vld [vmem:[%s475] sm:$0xf]
    %v477 = vld [vmem:[%s475 + $0x4] sm:$0xf]
    %v478 = vld [vmem:[%s475 + $0x8] sm:$0xf]
    %v479 = vld [vmem:[%s475 + $0xc] sm:$0xf]
    %v480 = vld [vmem:[%s475 + $0x10] sm:$0xf]
    %v481 = vld [vmem:[%s475 + $0x14] sm:$0xf]
    %v482 = vld [vmem:[%s475 + $0x18] sm:$0xf]
    %v483 = vld [vmem:[%s475 + $0x1c] sm:$0xf]
    %v484 = vld [vmem:[%s475 + $0x20] sm:$0xf]
    %v485 = vld [vmem:[%s475 + $0x24] sm:$0xf]
    %v486 = vld [vmem:[%s475 + $0x28] sm:$0xf]
    %v487 = vld [vmem:[%s475 + $0x2c] sm:$0xf]
    %v488 = vld [vmem:[%s475 + $0x30] sm:$0xf]
    %v489 = vld [vmem:[%s475 + $0x34] sm:$0xf]
    %v490 = vld [vmem:[%s475 + $0x38] sm:$0xf]
    %v491 = vld [vmem:[%s475 + $0x3c] sm:$0xf]
    %v492 = vld [vmem:[%s4 + $0x2] sm:$0x1]
    %v493 = vlaneseq
    %v494 = vshrl.u32 %v493, 7
    %v495 = vsub.s32 0, %v494
    %v496 = vrot.slane %v492, %v495
    %v513 = vunpack.c.l.b16 %v476
    %v514 = vunpack.c.l.b16 %v477
    %v515 = vunpack.c.l.b16 %v478
    %v516 = vunpack.c.l.b16 %v479
    %v517 = vunpack.c.l.b16 %v480
    %v518 = vunpack.c.l.b16 %v481
    %v519 = vunpack.c.l.b16 %v482
    %v520 = vunpack.c.l.b16 %v483
    %v521 = vunpack.c.l.b16 %v484
    %v522 = vunpack.c.l.b16 %v485
    %v523 = vunpack.c.l.b16 %v486
    %v524 = vunpack.c.l.b16 %v487
    %v525 = vunpack.c.l.b16 %v488
    %v526 = vunpack.c.l.b16 %v489
    %v527 = vunpack.c.l.b16 %v490
    %v528 = vunpack.c.l.b16 %v491
    %v529 = vpack.c.b16 %v514, %v513
    %v530 = vpack.c.b16 %v516, %v515
    %v531 = vpack.c.b16 %v518, %v517
    %v532 = vpack.c.b16 %v520, %v519
    %v533 = vpack.c.b16 %v522, %v521
    %v534 = vpack.c.b16 %v524, %v523
    %v535 = vpack.c.b16 %v526, %v525
    %v536 = vpack.c.b16 %v528, %v527
    %545 = vmatprep.subr.bf16.mxu0 0
    %546 = vmatpush1.bf16.msra.mxu0 %v529
    %547 = vmatprep.subr.bf16.mxu0 0
    %548 = vmatpush1.bf16.msra.mxu0 %v530
    %549 = vmatprep.subr.bf16.mxu0 0
    %550 = vmatpush1.bf16.msra.mxu0 %v531
    %551 = vmatprep.subr.bf16.mxu0 0
    %552 = vmatpush1.bf16.msra.mxu0 %v532
    %553 = vmatprep.subr.bf16.mxu0 0
    %554 = vmatpush1.bf16.msra.mxu0 %v533
    %555 = vmatprep.subr.bf16.mxu0 0
    %556 = vmatpush1.bf16.msra.mxu0 %v534
    %557 = vmatprep.subr.bf16.mxu0 0
    %558 = vmatpush1.bf16.msra.mxu0 %v535
    %559 = vmatprep.subr.bf16.mxu0 0
    %560 = vmatpush1.bf16.msra.mxu0 %v536
    %561 = vmatprep.subr.bf16.mxu0 0
    %562 = vmatpush1.bf16.msra.mxu0 0
    %563 = vmatprep.subr.bf16.mxu0 0
    %564 = vmatpush1.bf16.msra.mxu0 0
    %565 = vmatprep.subr.bf16.mxu0 0
    %566 = vmatpush1.bf16.msra.mxu0 0
    %567 = vmatprep.subr.bf16.mxu0 0
    %568 = vmatpush1.bf16.msra.mxu0 0
    %569 = vmatprep.subr.bf16.mxu0 0
    %570 = vmatpush1.bf16.msra.mxu0 0
    %571 = vmatprep.subr.bf16.mxu0 0
    %572 = vmatpush1.bf16.msra.mxu0 0
    %573 = vmatprep.subr.bf16.mxu0 0
    %574 = vmatpush1.bf16.msra.mxu0 0
    %575 = vmatprep.subr.bf16.mxu0 0
    %576 = vmatpush1.bf16.msra.mxu0 0
    %577 = vmatprep.mubr.bf16.mxu0 0
    %578 = vmatmul.mubr.bf16.gmra.mrb[0].mxu0 %v473
    %v579 = vpop.f32.mrb[0].mxu0
    %v580 = vadd.f32 %v496, %v579
    %v581 = vpop.f32.mrb[0].mxu0
    %v582 = vpop.f32.mrb[0].mxu0
    %v583 = vadd.f32 %v496, %v582
    %v584 = vpop.f32.mrb[0].mxu0
    %585 = vmatprep.mubr.bf16.mxu0 0
    %586 = vmatmul.mubr.bf16.gmra.mrb[0].mxu0 %v474
    %v587 = vpop.f32.mrb[0].mxu0
    %v588 = vadd.f32 %v496, %v587
    %v589 = vpop.f32.mrb[0].mxu0
    %v590 = vpop.f32.mrb[0].mxu0
    %v591 = vadd.f32 %v496, %v590
    %v592 = vpop.f32.mrb[0].mxu0
    %593 = vdwg.mxu0
    %v594 = vmax.f32 %v580, 0.0
    %v595 = vmax.f32 %v583, 0.0
    %v596 = vmax.f32 %v588, 0.0
    %v597 = vmax.f32 %v591, 0.0
    %v598 = vpack.c.bf16 %v595, %v594
    %v599 = vpack.c.bf16 %v597, %v596
    %600 = vmatprep.subr.bf16.mxu0 0
    %601 = vmatpush1.bf16.msra.mxu0 %v598
    %602 = vmatprep.subr.bf16.mxu0 0
    %603 = vmatpush1.bf16.msra.mxu0 %v599
    %604 = vmatprep.subr.bf16.mxu0 0
    %605 = vmatpush1.bf16.msra.mxu0 0
    %606 = vmatprep.subr.bf16.mxu0 0
    %607 = vmatpush1.bf16.msra.mxu0 0
    %608 = vmatprep.subr.bf16.mxu0 0
    %609 = vmatpush1.bf16.msra.mxu0 0
    %610 = vmatprep.subr.bf16.mxu0 0
    %611 = vmatpush1.bf16.msra.mxu0 0
    %612 = vmatprep.subr.bf16.mxu0 0
    %613 = vmatpush1.bf16.msra.mxu0 0
    %614 = vmatprep.subr.bf16.mxu0 0
    %615 = vmatpush1.bf16.msra.mxu0 0
    %616 = vmatprep.subr.bf16.mxu0 0
    %617 = vmatpush1.bf16.msra.mxu0 0
    %618 = vmatprep.subr.bf16.mxu0 0
    %619 = vmatpush1.bf16.msra.mxu0 0
    %620 = vmatprep.subr.bf16.mxu0 0
    %621 = vmatpush1.bf16.msra.mxu0 0
    %622 = vmatprep.subr.bf16.mxu0 0
    %623 = vmatpush1.bf16.msra.mxu0 0
    %624 = vmatprep.subr.bf16.mxu0 0
    %625 = vmatpush1.bf16.msra.mxu0 0
    %626 = vmatprep.subr.bf16.mxu0 0
    %627 = vmatpush1.bf16.msra.mxu0 0
    %628 = vmatprep.subr.bf16.mxu0 0
    %629 = vmatpush1.bf16.msra.mxu0 0
    %630 = vmatprep.subr.bf16.mxu0 0
    %631 = vmatpush1.bf16.msra.mxu0 0
    %632 = vmatprep.mubr.bf16.mxu0 0
    %633 = vmatmul.mubr.bf16.gmra.mrb[0].mxu0 %v68
    %v634 = vpop.f32.mrb[0].mxu0
    %v635 = vadd.f32 0.0, %v634
    %v636 = vpop.f32.mrb[0].mxu0
    %v637 = vpop.f32.mrb[0].mxu0
    %v638 = vadd.f32 0.0, %v637
    %v639 = vpop.f32.mrb[0].mxu0
    %640 = vmatprep.mubr.bf16.mxu0 0
    %641 = vmatmul.mubr.bf16.gmra.mrb[0].mxu0 %v71
    %v642 = vpop.f32.mrb[0].mxu0
    %v643 = vadd.f32 0.0, %v642
    %v644 = vpop.f32.mrb[0].mxu0
    %v645 = vpop.f32.mrb[0].mxu0
    %v646 = vadd.f32 0.0, %v645
    %v647 = vpop.f32.mrb[0].mxu0
    %648 = vdwg.mxu0
    %v649 = vpack.c.bf16 %v638, %v635
    %v650 = vpack.c.bf16 %v646, %v643
    %s651 = scalar_lea.vmem [#allocation3], 192
    %v652 = vld [vmem:[%s651] sm:$0xf]
    %v653 = vld [vmem:[%s651 + $0x4] sm:$0xf]
    %v654 = vld [vmem:[%s651 + $0x8] sm:$0xf]
    %v655 = vld [vmem:[%s651 + $0xc] sm:$0xf]
    %v656 = vld [vmem:[%s651 + $0x10] sm:$0xf]
    %v657 = vld [vmem:[%s651 + $0x14] sm:$0xf]
    %v658 = vld [vmem:[%s651 + $0x18] sm:$0xf]
    %v659 = vld [vmem:[%s651 + $0x1c] sm:$0xf]
    %v660 = vld [vmem:[%s651 + $0x20] sm:$0xf]
    %v661 = vld [vmem:[%s651 + $0x24] sm:$0xf]
    %v662 = vld [vmem:[%s651 + $0x28] sm:$0xf]
    %v663 = vld [vmem:[%s651 + $0x2c] sm:$0xf]
    %v664 = vld [vmem:[%s651 + $0x30] sm:$0xf]
    %v665 = vld [vmem:[%s651 + $0x34] sm:$0xf]
    %v666 = vld [vmem:[%s651 + $0x38] sm:$0xf]
    %v667 = vld [vmem:[%s651 + $0x3c] sm:$0xf]
    %v668 = vld [vmem:[%s4 + $0x3] sm:$0x1]
    %v669 = vlaneseq
    %v670 = vshrl.u32 %v669, 7
    %v671 = vsub.s32 0, %v670
    %v672 = vrot.slane %v668, %v671
    %v689 = vunpack.c.l.b16 %v652
    %v690 = vunpack.c.l.b16 %v653
    %v691 = vunpack.c.l.b16 %v654
    %v692 = vunpack.c.l.b16 %v655
    %v693 = vunpack.c.l.b16 %v656
    %v694 = vunpack.c.l.b16 %v657
    %v695 = vunpack.c.l.b16 %v658
    %v696 = vunpack.c.l.b16 %v659
    %v697 = vunpack.c.l.b16 %v660
    %v698 = vunpack.c.l.b16 %v661
    %v699 = vunpack.c.l.b16 %v662
    %v700 = vunpack.c.l.b16 %v663
    %v701 = vunpack.c.l.b16 %v664
    %v702 = vunpack.c.l.b16 %v665
    %v703 = vunpack.c.l.b16 %v666
    %v704 = vunpack.c.l.b16 %v667
    %v705 = vpack.c.b16 %v690, %v689
    %v706 = vpack.c.b16 %v692, %v691
    %v707 = vpack.c.b16 %v694, %v693
    %v708 = vpack.c.b16 %v696, %v695
    %v709 = vpack.c.b16 %v698, %v697
    %v710 = vpack.c.b16 %v700, %v699
    %v711 = vpack.c.b16 %v702, %v701
    %v712 = vpack.c.b16 %v704, %v703
    %721 = vmatprep.subr.bf16.mxu0 0
    %722 = vmatpush1.bf16.msra.mxu0 %v705
    %723 = vmatprep.subr.bf16.mxu0 0
    %724 = vmatpush1.bf16.msra.mxu0 %v706
    %725 = vmatprep.subr.bf16.mxu0 0
    %726 = vmatpush1.bf16.msra.mxu0 %v707
    %727 = vmatprep.subr.bf16.mxu0 0
    %728 = vmatpush1.bf16.msra.mxu0 %v708
    %729 = vmatprep.subr.bf16.mxu0 0
    %730 = vmatpush1.bf16.msra.mxu0 %v709
    %731 = vmatprep.subr.bf16.mxu0 0
    %732 = vmatpush1.bf16.msra.mxu0 %v710
    %733 = vmatprep.subr.bf16.mxu0 0
    %734 = vmatpush1.bf16.msra.mxu0 %v711
    %735 = vmatprep.subr.bf16.mxu0 0
    %736 = vmatpush1.bf16.msra.mxu0 %v712
    %737 = vmatprep.subr.bf16.mxu0 0
    %738 = vmatpush1.bf16.msra.mxu0 0
    %739 = vmatprep.subr.bf16.mxu0 0
    %740 = vmatpush1.bf16.msra.mxu0 0
    %741 = vmatprep.subr.bf16.mxu0 0
    %742 = vmatpush1.bf16.msra.mxu0 0
    %743 = vmatprep.subr.bf16.mxu0 0
    %744 = vmatpush1.bf16.msra.mxu0 0
    %745 = vmatprep.subr.bf16.mxu0 0
    %746 = vmatpush1.bf16.msra.mxu0 0
    %747 = vmatprep.subr.bf16.mxu0 0
    %748 = vmatpush1.bf16.msra.mxu0 0
    %749 = vmatprep.subr.bf16.mxu0 0
    %750 = vmatpush1.bf16.msra.mxu0 0
    %751 = vmatprep.subr.bf16.mxu0 0
    %752 = vmatpush1.bf16.msra.mxu0 0
    %753 = vmatprep.mubr.bf16.mxu0 0
    %754 = vmatmul.mubr.bf16.gmra.mrb[0].mxu0 %v649
    %v755 = vpop.f32.mrb[0].mxu0
    %v756 = vadd.f32 %v672, %v755
    %v757 = vpop.f32.mrb[0].mxu0
    %v758 = vpop.f32.mrb[0].mxu0
    %v759 = vadd.f32 %v672, %v758
    %v760 = vpop.f32.mrb[0].mxu0
    %761 = vmatprep.mubr.bf16.mxu0 0
    %762 = vmatmul.mubr.bf16.gmra.mrb[0].mxu0 %v650
    %v763 = vpop.f32.mrb[0].mxu0
    %v764 = vadd.f32 %v672, %v763
    %v765 = vpop.f32.mrb[0].mxu0
    %v766 = vpop.f32.mrb[0].mxu0
    %v767 = vadd.f32 %v672, %v766
    %v768 = vpop.f32.mrb[0].mxu0
    %769 = vdwg.mxu0
    %v770 = vmax.f32 %v756, 0.0
    %v771 = vmax.f32 %v759, 0.0
    %v772 = vmax.f32 %v764, 0.0
    %v773 = vmax.f32 %v767, 0.0
    %v774 = vpack.c.bf16 %v771, %v770
    %v775 = vpack.c.bf16 %v773, %v772
    %776 = vmatprep.subr.bf16.mxu0 0
    %777 = vmatpush1.bf16.msra.mxu0 %v774
    %778 = vmatprep.subr.bf16.mxu0 0
    %779 = vmatpush1.bf16.msra.mxu0 %v775
    %780 = vmatprep.subr.bf16.mxu0 0
    %781 = vmatpush1.bf16.msra.mxu0 0
    %782 = vmatprep.subr.bf16.mxu0 0
    %783 = vmatpush1.bf16.msra.mxu0 0
    %784 = vmatprep.subr.bf16.mxu0 0
    %785 = vmatpush1.bf16.msra.mxu0 0
    %786 = vmatprep.subr.bf16.mxu0 0
    %787 = vmatpush1.bf16.msra.mxu0 0
    %788 = vmatprep.subr.bf16.mxu0 0
    %789 = vmatpush1.bf16.msra.mxu0 0
    %790 = vmatprep.subr.bf16.mxu0 0
    %791 = vmatpush1.bf16.msra.mxu0 0
    %792 = vmatprep.subr.bf16.mxu0 0
    %793 = vmatpush1.bf16.msra.mxu0 0
    %794 = vmatprep.subr.bf16.mxu0 0
    %795 = vmatpush1.bf16.msra.mxu0 0
    %796 = vmatprep.subr.bf16.mxu0 0
    %797 = vmatpush1.bf16.msra.mxu0 0
    %798 = vmatprep.subr.bf16.mxu0 0
    %799 = vmatpush1.bf16.msra.mxu0 0
    %800 = vmatprep.subr.bf16.mxu0 0
    %801 = vmatpush1.bf16.msra.mxu0 0
    %802 = vmatprep.subr.bf16.mxu0 0
    %803 = vmatpush1.bf16.msra.mxu0 0
    %804 = vmatprep.subr.bf16.mxu0 0
    %805 = vmatpush1.bf16.msra.mxu0 0
    %806 = vmatprep.subr.bf16.mxu0 0
    %807 = vmatpush1.bf16.msra.mxu0 0
    %808 = vmatprep.mubr.bf16.mxu0 0
    %809 = vmatmul.mubr.bf16.gmra.mrb[0].mxu0 %v68
    %v810 = vpop.f32.mrb[0].mxu0
    %v811 = vadd.f32 0.0, %v810
    %v812 = vpop.f32.mrb[0].mxu0
    %v813 = vpop.f32.mrb[0].mxu0
    %v814 = vadd.f32 0.0, %v813
    %v815 = vpop.f32.mrb[0].mxu0
    %816 = vmatprep.mubr.bf16.mxu0 0
    %817 = vmatmul.mubr.bf16.gmra.mrb[0].mxu0 %v71
    %v818 = vpop.f32.mrb[0].mxu0
    %v819 = vadd.f32 0.0, %v818
    %v820 = vpop.f32.mrb[0].mxu0
    %v821 = vpop.f32.mrb[0].mxu0
    %v822 = vadd.f32 0.0, %v821
    %v823 = vpop.f32.mrb[0].mxu0
    %824 = vdwg.mxu0
    %v825 = vpack.c.bf16 %v814, %v811
    %v826 = vpack.c.bf16 %v822, %v819
    %s827 = scalar_lea.vmem [#allocation3], 256
    %v828 = vld [vmem:[%s827] sm:$0xf]
    %v829 = vld [vmem:[%s827 + $0x4] sm:$0xf]
    %v830 = vld [vmem:[%s827 + $0x8] sm:$0xf]
    %v831 = vld [vmem:[%s827 + $0xc] sm:$0xf]
    %v832 = vld [vmem:[%s827 + $0x10] sm:$0xf]
    %v833 = vld [vmem:[%s827 + $0x14] sm:$0xf]
    %v834 = vld [vmem:[%s827 + $0x18] sm:$0xf]
    %v835 = vld [vmem:[%s827 + $0x1c] sm:$0xf]
    %v836 = vld [vmem:[%s827 + $0x20] sm:$0xf]
    %v837 = vld [vmem:[%s827 + $0x24] sm:$0xf]
    %v838 = vld [vmem:[%s827 + $0x28] sm:$0xf]
    %v839 = vld [vmem:[%s827 + $0x2c] sm:$0xf]
    %v840 = vld [vmem:[%s827 + $0x30] sm:$0xf]
    %v841 = vld [vmem:[%s827 + $0x34] sm:$0xf]
    %v842 = vld [vmem:[%s827 + $0x38] sm:$0xf]
    %v843 = vld [vmem:[%s827 + $0x3c] sm:$0xf]
    %v844 = vld [vmem:[%s4 + $0x4] sm:$0x1]
    %v845 = vlaneseq
    %v846 = vshrl.u32 %v845, 7
    %v847 = vsub.s32 0, %v846
    %v848 = vrot.slane %v844, %v847
    %v865 = vunpack.c.l.b16 %v828
    %v866 = vunpack.c.l.b16 %v829
    %v867 = vunpack.c.l.b16 %v830
    %v868 = vunpack.c.l.b16 %v831
    %v869 = vunpack.c.l.b16 %v832
    %v870 = vunpack.c.l.b16 %v833
    %v871 = vunpack.c.l.b16 %v834
    %v872 = vunpack.c.l.b16 %v835
    %v873 = vunpack.c.l.b16 %v836
    %v874 = vunpack.c.l.b16 %v837
    %v875 = vunpack.c.l.b16 %v838
    %v876 = vunpack.c.l.b16 %v839
    %v877 = vunpack.c.l.b16 %v840
    %v878 = vunpack.c.l.b16 %v841
    %v879 = vunpack.c.l.b16 %v842
    %v880 = vunpack.c.l.b16 %v843
    %v881 = vpack.c.b16 %v866, %v865
    %v882 = vpack.c.b16 %v868, %v867
    %v883 = vpack.c.b16 %v870, %v869
    %v884 = vpack.c.b16 %v872, %v871
    %v885 = vpack.c.b16 %v874, %v873
    %v886 = vpack.c.b16 %v876, %v875
    %v887 = vpack.c.b16 %v878, %v877
    %v888 = vpack.c.b16 %v880, %v879
    %897 = vmatprep.subr.bf16.mxu0 0
    %898 = vmatpush1.bf16.msra.mxu0 %v881
    %899 = vmatprep.subr.bf16.mxu0 0
    %900 = vmatpush1.bf16.msra.mxu0 %v882
    %901 = vmatprep.subr.bf16.mxu0 0
    %902 = vmatpush1.bf16.msra.mxu0 %v883
    %903 = vmatprep.subr.bf16.mxu0 0
    %904 = vmatpush1.bf16.msra.mxu0 %v884
    %905 = vmatprep.subr.bf16.mxu0 0
    %906 = vmatpush1.bf16.msra.mxu0 %v885
    %907 = vmatprep.subr.bf16.mxu0 0
    %908 = vmatpush1.bf16.msra.mxu0 %v886
    %909 = vmatprep.subr.bf16.mxu0 0
    %910 = vmatpush1.bf16.msra.mxu0 %v887
    %911 = vmatprep.subr.bf16.mxu0 0
    %912 = vmatpush1.bf16.msra.mxu0 %v888
    %913 = vmatprep.subr.bf16.mxu0 0
    %914 = vmatpush1.bf16.msra.mxu0 0
    %915 = vmatprep.subr.bf16.mxu0 0
    %916 = vmatpush1.bf16.msra.mxu0 0
    %917 = vmatprep.subr.bf16.mxu0 0
    %918 = vmatpush1.bf16.msra.mxu0 0
    %919 = vmatprep.subr.bf16.mxu0 0
    %920 = vmatpush1.bf16.msra.mxu0 0
    %921 = vmatprep.subr.bf16.mxu0 0
    %922 = vmatpush1.bf16.msra.mxu0 0
    %923 = vmatprep.subr.bf16.mxu0 0
    %924 = vmatpush1.bf16.msra.mxu0 0
    %925 = vmatprep.subr.bf16.mxu0 0
    %926 = vmatpush1.bf16.msra.mxu0 0
    %927 = vmatprep.subr.bf16.mxu0 0
    %928 = vmatpush1.bf16.msra.mxu0 0
    %929 = vmatprep.mubr.bf16.mxu0 0
    %930 = vmatmul.mubr.bf16.gmra.mrb[0].mxu0 %v825
    %v931 = vpop.f32.mrb[0].mxu0
    %v932 = vadd.f32 %v848, %v931
    %v933 = vpop.f32.mrb[0].mxu0
    %v934 = vpop.f32.mrb[0].mxu0
    %v935 = vadd.f32 %v848, %v934
    %v936 = vpop.f32.mrb[0].mxu0
    %937 = vmatprep.mubr.bf16.mxu0 0
    %938 = vmatmul.mubr.bf16.gmra.mrb[0].mxu0 %v826
    %v939 = vpop.f32.mrb[0].mxu0
    %v940 = vadd.f32 %v848, %v939
    %v941 = vpop.f32.mrb[0].mxu0
    %v942 = vpop.f32.mrb[0].mxu0
    %v943 = vadd.f32 %v848, %v942
    %v944 = vpop.f32.mrb[0].mxu0
    %945 = vdwg.mxu0
    %v946 = vmax.f32 %v932, 0.0
    %v947 = vmax.f32 %v935, 0.0
    %v948 = vmax.f32 %v940, 0.0
    %v949 = vmax.f32 %v943, 0.0
    %v950 = vpack.c.bf16 %v947, %v946
    %v951 = vpack.c.bf16 %v949, %v948
    %v952 = vunpack.c.l.bf16 %v950
    %v953 = vunpack.c.h.bf16 %v950
    %v954 = vunpack.c.l.bf16 %v951
    %v955 = vunpack.c.h.bf16 %v951
    %v956 = vld [vmem:[%s2] sm:$0xff]
    %v957 = vld [vmem:[%s2 + $0x8] sm:$0xff]
    %v958 = vld [vmem:[%s2 + $0x10] sm:$0xff]
    %v959 = vld [vmem:[%s2 + $0x18] sm:$0xff]
    %961 = vset.pattern.permute.xlu0 0
    %962 = vperm.xlu0 %961, %v956
    %v963 = vpop.permute.xlu0 %962
    %966 = vset.pattern.permute.xlu0 0
    %967 = vperm.xlu0 %966, %v957
    %v968 = vpop.permute.xlu0 %967
    %971 = vset.pattern.permute.xlu0 0
    %972 = vperm.xlu0 %971, %v958
    %v973 = vpop.permute.xlu0 %972
    %976 = vset.pattern.permute.xlu0 0
    %977 = vperm.xlu0 %976, %v959
    %v978 = vpop.permute.xlu0 %977
    %v980 = vmul.f32 %v952, %v963
    %v981 = vmul.f32 %v953, %v968
    %v982 = vmul.f32 %v954, %v973
    %v983 = vmul.f32 %v955, %v978
    %v984 = vmax.f32 %v980, %v981
    %v985 = vmax.f32 %v982, %v983
    %v986 = vmax.f32 %v984, %v985
    %v987 = vrot.slane %v986, 4
    %v988 = vmax.f32 %v986, %v987
    %v989 = vrot.slane %v988, 2
    %v990 = vmax.f32 %v988, %v989
    %v991 = vrot.slane %v990, 1
    %v992 = vmax.f32 %v990, %v991
    %993 = vst [vmem:[#allocation2] sm:$0x1] %v992
    %v994 = vld [vmem:[%s2] sm:$0xff]
    %v995 = vld [vmem:[%s2 + $0x8] sm:$0xff]
    %v996 = vld [vmem:[%s2 + $0x10] sm:$0xff]
    %v997 = vld [vmem:[%s2 + $0x18] sm:$0xff]
    %999 = vset.pattern.permute.xlu0 1
    %1000 = vperm.xlu0 %999, %v994
    %v1001 = vpop.permute.xlu0 %1000
    %1004 = vset.pattern.permute.xlu0 1
    %1005 = vperm.xlu0 %1004, %v995
    %v1006 = vpop.permute.xlu0 %1005
    %1009 = vset.pattern.permute.xlu0 1
    %1010 = vperm.xlu0 %1009, %v996
    %v1011 = vpop.permute.xlu0 %1010
    %1014 = vset.pattern.permute.xlu0 1
    %1015 = vperm.xlu0 %1014, %v997
    %v1016 = vpop.permute.xlu0 %1015
    %v1018 = vmul.f32 %v952, %v1001
    %v1019 = vmul.f32 %v953, %v1006
    %v1020 = vmul.f32 %v954, %v1011
    %v1021 = vmul.f32 %v955, %v1016
    %v1022 = vmax.f32 %v1018, %v1019
    %v1023 = vmax.f32 %v1020, %v1021
    %v1024 = vmax.f32 %v1022, %v1023
    %v1025 = vrot.slane %v1024, 4
    %v1026 = vmax.f32 %v1024, %v1025
    %v1027 = vrot.slane %v1026, 2
    %v1028 = vmax.f32 %v1026, %v1027
    %v1029 = vrot.slane %v1028, 1
    %v1030 = vmax.f32 %v1028, %v1029
    %1031 = vst [vmem:[#allocation2 + $0x1] sm:$0x1] %v1030
    %v1032 = vld [vmem:[#allocation2] sm:$0x3]
    %v1033 = vpack.c.bf16 %v1032, %v1032
    %s1034 = scalar_lea.vmem [#allocation3], 320
    %v1035 = vld [vmem:[%s1034] sm:$0xf]
    %v1036 = vld [vmem:[%s1034 + $0x4] sm:$0xf]
    %v1037 = vld [vmem:[%s1034 + $0x8] sm:$0xf]
    %v1038 = vld [vmem:[%s1034 + $0xc] sm:$0xf]
    %v1039 = vld [vmem:[%s1034 + $0x10] sm:$0xf]
    %v1040 = vld [vmem:[%s1034 + $0x14] sm:$0xf]
    %v1041 = vld [vmem:[%s1034 + $0x18] sm:$0xf]
    %v1042 = vld [vmem:[%s1034 + $0x1c] sm:$0xf]
    %v1043 = vld [vmem:[%s1034 + $0x20] sm:$0xf]
    %v1044 = vld [vmem:[%s1034 + $0x24] sm:$0xf]
    %v1045 = vld [vmem:[%s1034 + $0x28] sm:$0xf]
    %v1046 = vld [vmem:[%s1034 + $0x2c] sm:$0xf]
    %v1047 = vld [vmem:[%s1034 + $0x30] sm:$0xf]
    %v1048 = vld [vmem:[%s1034 + $0x34] sm:$0xf]
    %v1049 = vld [vmem:[%s1034 + $0x38] sm:$0xf]
    %v1050 = vld [vmem:[%s1034 + $0x3c] sm:$0xf]
    %v1051 = vld [vmem:[%s4 + $0x5] sm:$0x1]
    %v1052 = vlaneseq
    %v1053 = vshrl.u32 %v1052, 7
    %v1054 = vsub.s32 0, %v1053
    %v1055 = vrot.slane %v1051, %v1054
    %v1072 = vunpack.c.l.b16 %v1035
    %v1073 = vunpack.c.l.b16 %v1036
    %v1074 = vunpack.c.l.b16 %v1037
    %v1075 = vunpack.c.l.b16 %v1038
    %v1076 = vunpack.c.l.b16 %v1039
    %v1077 = vunpack.c.l.b16 %v1040
    %v1078 = vunpack.c.l.b16 %v1041
    %v1079 = vunpack.c.l.b16 %v1042
    %v1080 = vunpack.c.l.b16 %v1043
    %v1081 = vunpack.c.l.b16 %v1044
    %v1082 = vunpack.c.l.b16 %v1045
    %v1083 = vunpack.c.l.b16 %v1046
    %v1084 = vunpack.c.l.b16 %v1047
    %v1085 = vunpack.c.l.b16 %v1048
    %v1086 = vunpack.c.l.b16 %v1049
    %v1087 = vunpack.c.l.b16 %v1050
    %v1088 = vpack.c.b16 %v1073, %v1072
    %v1089 = vpack.c.b16 %v1075, %v1074
    %v1090 = vpack.c.b16 %v1077, %v1076
    %v1091 = vpack.c.b16 %v1079, %v1078
    %v1092 = vpack.c.b16 %v1081, %v1080
    %v1093 = vpack.c.b16 %v1083, %v1082
    %v1094 = vpack.c.b16 %v1085, %v1084
    %v1095 = vpack.c.b16 %v1087, %v1086
    %1104 = vmatprep.subr.bf16.mxu0 0
    %1105 = vmatpush1.bf16.msra.mxu0 %v1088
    %1106 = vmatprep.subr.bf16.mxu0 0
    %1107 = vmatpush1.bf16.msra.mxu0 %v1089
    %1108 = vmatprep.subr.bf16.mxu0 0
    %1109 = vmatpush1.bf16.msra.mxu0 %v1090
    %1110 = vmatprep.subr.bf16.mxu0 0
    %1111 = vmatpush1.bf16.msra.mxu0 %v1091
    %1112 = vmatprep.subr.bf16.mxu0 0
    %1113 = vmatpush1.bf16.msra.mxu0 %v1092
    %1114 = vmatprep.subr.bf16.mxu0 0
    %1115 = vmatpush1.bf16.msra.mxu0 %v1093
    %1116 = vmatprep.subr.bf16.mxu0 0
    %1117 = vmatpush1.bf16.msra.mxu0 %v1094
    %1118 = vmatprep.subr.bf16.mxu0 0
    %1119 = vmatpush1.bf16.msra.mxu0 %v1095
    %1120 = vmatprep.subr.bf16.mxu0 0
    %1121 = vmatpush1.bf16.msra.mxu0 0
    %1122 = vmatprep.subr.bf16.mxu0 0
    %1123 = vmatpush1.bf16.msra.mxu0 0
    %1124 = vmatprep.subr.bf16.mxu0 0
    %1125 = vmatpush1.bf16.msra.mxu0 0
    %1126 = vmatprep.subr.bf16.mxu0 0
    %1127 = vmatpush1.bf16.msra.mxu0 0
    %1128 = vmatprep.subr.bf16.mxu0 0
    %1129 = vmatpush1.bf16.msra.mxu0 0
    %1130 = vmatprep.subr.bf16.mxu0 0
    %1131 = vmatpush1.bf16.msra.mxu0 0
    %1132 = vmatprep.subr.bf16.mxu0 0
    %1133 = vmatpush1.bf16.msra.mxu0 0
    %1134 = vmatprep.subr.bf16.mxu0 0
    %1135 = vmatpush1.bf16.msra.mxu0 0
    %1136 = vmatprep.mubr.bf16.mxu0 0
    %1137 = vmatmul.mubr.bf16.gmra.mrb[0].mxu0 %v1033
    %v1138 = vpop.f32.mrb[0].mxu0
    %v1139 = vadd.f32 %v1055, %v1138
    %v1140 = vpop.f32.mrb[0].mxu0
    %v1141 = vpop.f32.mrb[0].mxu0
    %v1142 = vpop.f32.mrb[0].mxu0
    %1143 = vdwg.mxu0
    %v1144 = vmax.f32 %v1139, 0.0
    %v1145 = vpack.c.bf16 %v1144, %v1144
    %s1146 = scalar_lea.vmem [#allocation3], 384
    %v1147 = vld [vmem:[%s1146] sm:$0xf]
    %v1148 = vld [vmem:[%s1146 + $0x4] sm:$0xf]
    %v1149 = vld [vmem:[%s1146 + $0x8] sm:$0xf]
    %v1150 = vld [vmem:[%s1146 + $0xc] sm:$0xf]
    %v1151 = vld [vmem:[%s1146 + $0x10] sm:$0xf]
    %v1152 = vld [vmem:[%s1146 + $0x14] sm:$0xf]
    %v1153 = vld [vmem:[%s1146 + $0x18] sm:$0xf]
    %v1154 = vld [vmem:[%s1146 + $0x1c] sm:$0xf]
    %v1155 = vld [vmem:[%s1146 + $0x20] sm:$0xf]
    %v1156 = vld [vmem:[%s1146 + $0x24] sm:$0xf]
    %v1157 = vld [vmem:[%s1146 + $0x28] sm:$0xf]
    %v1158 = vld [vmem:[%s1146 + $0x2c] sm:$0xf]
    %v1159 = vld [vmem:[%s1146 + $0x30] sm:$0xf]
    %v1160 = vld [vmem:[%s1146 + $0x34] sm:$0xf]
    %v1161 = vld [vmem:[%s1146 + $0x38] sm:$0xf]
    %v1162 = vld [vmem:[%s1146 + $0x3c] sm:$0xf]
    %v1163 = vld [vmem:[%s4 + $0x6] sm:$0x1]
    %v1164 = vlaneseq
    %v1165 = vshrl.u32 %v1164, 7
    %v1166 = vsub.s32 0, %v1165
    %v1167 = vrot.slane %v1163, %v1166
    %v1184 = vunpack.c.l.b16 %v1147
    %v1185 = vunpack.c.l.b16 %v1148
    %v1186 = vunpack.c.l.b16 %v1149
    %v1187 = vunpack.c.l.b16 %v1150
    %v1188 = vunpack.c.l.b16 %v1151
    %v1189 = vunpack.c.l.b16 %v1152
    %v1190 = vunpack.c.l.b16 %v1153
    %v1191 = vunpack.c.l.b16 %v1154
    %v1192 = vunpack.c.l.b16 %v1155
    %v1193 = vunpack.c.l.b16 %v1156
    %v1194 = vunpack.c.l.b16 %v1157
    %v1195 = vunpack.c.l.b16 %v1158
    %v1196 = vunpack.c.l.b16 %v1159
    %v1197 = vunpack.c.l.b16 %v1160
    %v1198 = vunpack.c.l.b16 %v1161
    %v1199 = vunpack.c.l.b16 %v1162
    %v1200 = vpack.c.b16 %v1185, %v1184
    %v1201 = vpack.c.b16 %v1187, %v1186
    %v1202 = vpack.c.b16 %v1189, %v1188
    %v1203 = vpack.c.b16 %v1191, %v1190
    %v1204 = vpack.c.b16 %v1193, %v1192
    %v1205 = vpack.c.b16 %v1195, %v1194
    %v1206 = vpack.c.b16 %v1197, %v1196
    %v1207 = vpack.c.b16 %v1199, %v1198
    %1216 = vmatprep.subr.bf16.mxu0 0
    %1217 = vmatpush1.bf16.msra.mxu0 %v1200
    %1218 = vmatprep.subr.bf16.mxu0 0
    %1219 = vmatpush1.bf16.msra.mxu0 %v1201
    %1220 = vmatprep.subr.bf16.mxu0 0
    %1221 = vmatpush1.bf16.msra.mxu0 %v1202
    %1222 = vmatprep.subr.bf16.mxu0 0
    %1223 = vmatpush1.bf16.msra.mxu0 %v1203
    %1224 = vmatprep.subr.bf16.mxu0 0
    %1225 = vmatpush1.bf16.msra.mxu0 %v1204
    %1226 = vmatprep.subr.bf16.mxu0 0
    %1227 = vmatpush1.bf16.msra.mxu0 %v1205
    %1228 = vmatprep.subr.bf16.mxu0 0
    %1229 = vmatpush1.bf16.msra.mxu0 %v1206
    %1230 = vmatprep.subr.bf16.mxu0 0
    %1231 = vmatpush1.bf16.msra.mxu0 %v1207
    %1232 = vmatprep.subr.bf16.mxu0 0
    %1233 = vmatpush1.bf16.msra.mxu0 0
    %1234 = vmatprep.subr.bf16.mxu0 0
    %1235 = vmatpush1.bf16.msra.mxu0 0
    %1236 = vmatprep.subr.bf16.mxu0 0
    %1237 = vmatpush1.bf16.msra.mxu0 0
    %1238 = vmatprep.subr.bf16.mxu0 0
    %1239 = vmatpush1.bf16.msra.mxu0 0
    %1240 = vmatprep.subr.bf16.mxu0 0
    %1241 = vmatpush1.bf16.msra.mxu0 0
    %1242 = vmatprep.subr.bf16.mxu0 0
    %1243 = vmatpush1.bf16.msra.mxu0 0
    %1244 = vmatprep.subr.bf16.mxu0 0
    %1245 = vmatpush1.bf16.msra.mxu0 0
    %1246 = vmatprep.subr.bf16.mxu0 0
    %1247 = vmatpush1.bf16.msra.mxu0 0
    %1248 = vmatprep.mubr.bf16.mxu0 0
    %1249 = vmatmul.mubr.bf16.gmra.mrb[0].mxu0 %v1145
    %v1250 = vpop.f32.mrb[0].mxu0
    %v1251 = vadd.f32 %v1167, %v1250
    %v1252 = vpop.f32.mrb[0].mxu0
    %v1253 = vpop.f32.mrb[0].mxu0
    %v1254 = vpop.f32.mrb[0].mxu0
    %1255 = vdwg.mxu0
    %1256 = vst [vmem:[#allocation6] sm:$0x3] %v1251
    // Predicated region
    $region26: #{tpu_custom_call.1} parent=1 // pred_check
      _
    $region27: #{tpu_custom_call.1} parent=1 // pred_check_branch
      %1258 = sbr.rel (0) target = $region29
    $region28: #{tpu_custom_call.1} parent=1 // pred_region
      %s1260 = ssub.s32 32, 32
      %1261 = vsyncadd [#allocation5], %s1260
      %s1263 = sshll.u32 [#allocation6], 4
      %s1264 = int_to_ptr.vmem [resolvable:$true] %s1263
      %1266 = dma.vmem_to_hbm [thread:$0]  %s1264, 32, %s5, [#allocation5]
    $region29: #{tpu_custom_call.1} parent=1 // pred_fallthru
      _
    // Predicated region
    $region30: #{tpu_custom_call.1} parent=1 // pred_check
      _
    $region31: #{tpu_custom_call.1} parent=1 // pred_check_branch
      %1268 = sbr.rel (0) target = $region33
    $region32: #{tpu_custom_call.1} parent=1 // pred_region
      %1269 = dma.done [#allocation5], 32
    $region33: #{tpu_custom_call.1} parent=1 // pred_fallthru
      _
    %1270 = vsyncpa [#allocation4], 1
    %1271 = vsyncpa [#allocation5], 1

</llo_original>
